<compile_context>
chip_gen: v6e
topology: v6e:2x2x1
jax: 0.10.0
libtpu: 0.0.40
codegen_flags: <defaults>
</compile_context>

<pallas_src>
import functools

import numpy as np
import jax
import jax.numpy as jnp
from jax import lax
from jax.experimental import pallas as pl
from jax.experimental.pallas import tpu as pltpu


# --------------------------- weighted-CE kernel -------------------------------
def _ce_kernel(scores_ref, labels_ref, out_ref, num_acc, den_acc,
               *, n_rows, no_prob, yes_prob):
    n_i = pl.program_id(0)
    h_i = pl.program_id(1)
    is_first = jnp.logical_and(n_i == 0, h_i == 0)
    is_last = jnp.logical_and(n_i == pl.num_programs(0) - 1,
                              h_i == pl.num_programs(1) - 1)

    @pl.when(is_first)
    def _():
        num_acc[...] = jnp.zeros_like(num_acc)
        den_acc[...] = jnp.zeros_like(den_acc)

    s0 = scores_ref[0, 0]            # (TH, W) logits, class 0
    s1 = scores_ref[0, 1]            # (TH, W) logits, class 1
    y = labels_ref[0]                # (TH, W) int32 targets in {0, 1}

    # Mask rows of the (possibly padded) tail H tile.
    th = s0.shape[0]
    row = h_i * th + lax.broadcasted_iota(jnp.int32, s0.shape, 0)
    valid = row < n_rows

    # Per-element class weight (zeroed on padded rows).
    w = jnp.where(y == 1, jnp.float32(yes_prob), jnp.float32(no_prob))
    w = jnp.where(valid, w, jnp.float32(0.0))

    # Two-class cross entropy: -log softmax(x)[y] == softplus(x_other - x_y),
    # computed in the numerically stable form max(d,0) + log(1 + exp(-|d|)).
    d = jnp.where(y == 1, s0 - s1, s1 - s0)
    d = jnp.where(valid, d, jnp.float32(0.0))
    nll = jnp.maximum(d, 0.0) + jnp.log(1.0 + jnp.exp(-jnp.abs(d)))

    num_acc[...] += jnp.sum(w * nll, keepdims=True)
    den_acc[...] += jnp.sum(w, keepdims=True)

    @pl.when(is_last)
    def _():
        # den > 0 whenever the class weights are positive and there is at
        # least one element, which the module guarantees.
        out_ref[...] = num_acc[...] / den_acc[...]


def _weighted_ce(scores, labels, no_prob, yes_prob, h_tile=256):
    """scores: (N, 2, H, W) f32, labels: (N, H, W) int32 -> scalar loss."""
    N, C, H, W = scores.shape
    # H tile: multiple of 8 (sublane) or the full H dim; W stays full (lanes).
    TH = min(H, h_tile) if H % 8 == 0 else H
    grid = (N, pl.cdiv(H, TH))
    # TODO(synk): for extremely wide W add a W-tile grid axis as well.

    kernel = functools.partial(
        _ce_kernel, n_rows=H, no_prob=float(no_prob), yes_prob=float(yes_prob))

    out = pl.pallas_call(
        kernel,
        out_shape=jax.ShapeDtypeStruct((1, 1), jnp.float32),
        grid_spec=pltpu.PrefetchScalarGridSpec(
            num_scalar_prefetch=0,
            grid=grid,
            in_specs=[
                pl.BlockSpec((1, C, TH, W), lambda n, h: (n, 0, h, 0)),
                pl.BlockSpec((1, TH, W), lambda n, h: (n, h, 0)),
            ],
            out_specs=pl.BlockSpec((1, 1), lambda n, h: (0, 0)),
            scratch_shapes=[pltpu.VMEM((1, 1), jnp.float32),
                            pltpu.VMEM((1, 1), jnp.float32)],
        ),
        compiler_params=pltpu.CompilerParams(
            dimension_semantics=("arbitrary", "arbitrary")),
    )(scores, labels)
    return out[0, 0]


# --------------------------------- wrapper ------------------------------------
def celoss_forward(score, label, no_prob, yes_prob):
    """Mirrors CELoss.forward; the dim fixups / truncation are host glue."""
    scores = score
    labels = label
    if scores.ndim == 3:
        scores = scores[None]
    if labels.ndim == 2:
        labels = labels[None]
    labels = labels.astype(jnp.int32)          # labels.type(torch.long)
    if labels.shape[-2] != scores.shape[-2]:
        n = scores.shape[-2]
        labels = labels[..., -n:, :]

    assert scores.ndim == 4 and labels.ndim == 3
    N, C, H, W = scores.shape
    assert C == 2, "CELoss weight tensor has exactly 2 classes"
    assert labels.shape == (N, H, W)

    loss = _weighted_ce(scores.astype(jnp.float32), labels, no_prob, yes_prob)
    return dict(loss=loss)


# ------------------------------ numpy reference --------------------------------
def reference_forward(score, label, no_prob, yes_prob):
    scores = np.asarray(score, np.float64)
    labels = np.asarray(label)
    if scores.ndim == 3:
        scores = scores[None]
    if labels.ndim == 2:
        labels = labels[None]
    labels = labels.astype(np.int64)
    if labels.shape[-2] != scores.shape[-2]:
        n = scores.shape[-2]
        labels = labels[..., -n:, :]
    # torch nn.CrossEntropyLoss(weight=[no, yes]), reduction='mean':
    #   sum_i w[y_i] * (-log softmax(x_i)[y_i]) / sum_i w[y_i]
    m = scores.max(axis=1, keepdims=True)
    logp = scores - m - np.log(np.exp(scores - m).sum(axis=1, keepdims=True))
    sel = np.take_along_axis(logp, labels[:, None, :, :], axis=1)[:, 0]
    w = np.where(labels == 1, yes_prob, no_prob)
    return float((w * -sel).sum() / w.sum())


# ----------------------------------- main --------------------------------------
if __name__ == "__main__":
    no_prob, yes_prob = 0.3, 0.7
    C, H, W = 2, 16, 128     # lane-dense last dim
    H_lab = 18               # exercises the labels[..., -n:, :] truncation branch

    key = jax.random.PRNGKey(0)
    k_s, k_l = jax.random.split(key)
    score = jax.random.normal(k_s, (C, H, W), jnp.float32)           # 3-D score path
    label = jax.random.randint(k_l, (H_lab, W), 0, 2, jnp.int32)     # 2-D label path

    out = celoss_forward(score, label, no_prob, yes_prob)
    loss = jax.block_until_ready(out["loss"])

    ref = reference_forward(np.asarray(score), np.asarray(label), no_prob, yes_prob)
    np.testing.assert_allclose(np.asarray(loss), ref, rtol=1e-5, atol=1e-6)

    print("KERNEL_OK")
</pallas_src>

<mosaic_0001>
module attributes {stable_mosaic.version = 11 : i64} {
  func.func @_ce_kernel(%arg0: i32, %arg1: i32, %arg2: memref<1x2x16x128xf32, #tpu.memory_space<vmem>>, %arg3: memref<1x16x128xi32, #tpu.memory_space<vmem>>, %arg4: memref<1x1xf32, #tpu.memory_space<vmem>>, %arg5: memref<1x1xf32, #tpu.memory_space<vmem>>, %arg6: memref<1x1xf32, #tpu.memory_space<vmem>>) attributes {dimension_semantics = [#tpu.dimension_semantics<arbitrary>, #tpu.dimension_semantics<arbitrary>], iteration_bounds = array<i64: 1, 1>, scalar_prefetch = 0 : i64, scratch_operands = 2 : i64, tpu.core_type = #tpu.core_type<tc>, window_params = [{transform_indices = @transform_0, window_bounds = array<i64: 1, 2, 16, 128>}, {transform_indices = @transform_1, window_bounds = array<i64: 1, 16, 128>}, {pipeline_mode = #tpu.pipeline_mode<synchronous>, transform_indices = @transform_2, window_bounds = array<i64: 1, 1>}]} {
    %c0_i32 = arith.constant 0 : i32
    %0 = arith.cmpi eq, %arg0, %c0_i32 : i32
    %c0_i32_0 = arith.constant 0 : i32
    %1 = arith.cmpi eq, %arg1, %c0_i32_0 : i32
    %2 = arith.andi %0, %1 : i1
    %c0_i32_1 = arith.constant 0 : i32
    %3 = arith.cmpi eq, %arg0, %c0_i32_1 : i32
    %c0_i32_2 = arith.constant 0 : i32
    %4 = arith.cmpi eq, %arg1, %c0_i32_2 : i32
    %5 = arith.andi %3, %4 : i1
    %6 = arith.extui %2 : i1 to i32
    %c0_i32_3 = arith.constant 0 : i32
    %7 = arith.cmpi ne, %6, %c0_i32_3 : i32
    scf.if %7 {
      %cst_32 = arith.constant 0.000000e+00 : f32
      %63 = vector.broadcast %cst_32 : f32 to vector<1x1xf32>
      %c0_33 = arith.constant 0 : index
      %c0_34 = arith.constant 0 : index
      %64 = vector.load %arg5[%c0_33, %c0_34] : memref<1x1xf32, #tpu.memory_space<vmem>>, vector<1x1xf32>
      tpu.vector_store %arg5[%c0_33, %c0_34], %63 {strides = array<i32>} : memref<1x1xf32, #tpu.memory_space<vmem>>, vector<1x1xf32>,
      %cst_35 = arith.constant 0.000000e+00 : f32
      %65 = vector.broadcast %cst_35 : f32 to vector<1x1xf32>
      %c0_36 = arith.constant 0 : index
      %c0_37 = arith.constant 0 : index
      %66 = vector.load %arg6[%c0_36, %c0_37] : memref<1x1xf32, #tpu.memory_space<vmem>>, vector<1x1xf32>
      tpu.vector_store %arg6[%c0_36, %c0_37], %65 {strides = array<i32>} : memref<1x1xf32, #tpu.memory_space<vmem>>, vector<1x1xf32>,
    } else {
    }
    %c0 = arith.constant 0 : index
    %c0_4 = arith.constant 0 : index
    %c0_5 = arith.constant 0 : index
    %c0_6 = arith.constant 0 : index
    %8 = vector.load %arg2[%c0, %c0_4, %c0_5, %c0_6] : memref<1x2x16x128xf32, #tpu.memory_space<vmem>>, vector<1x1x16x128xf32>
    %9 = vector.shape_cast %8 : vector<1x1x16x128xf32> to vector<16x128xf32>
    %c0_7 = arith.constant 0 : index
    %c1 = arith.constant 1 : index
    %c0_8 = arith.constant 0 : index
    %c0_9 = arith.constant 0 : index
    %10 = vector.load %arg2[%c0_7, %c1, %c0_8, %c0_9] : memref<1x2x16x128xf32, #tpu.memory_space<vmem>>, vector<1x1x16x128xf32>
    %11 = vector.shape_cast %10 : vector<1x1x16x128xf32> to vector<16x128xf32>
    %c0_10 = arith.constant 0 : index
    %c0_11 = arith.constant 0 : index
    %c0_12 = arith.constant 0 : index
    %12 = vector.load %arg3[%c0_10, %c0_11, %c0_12] : memref<1x16x128xi32, #tpu.memory_space<vmem>>, vector<1x16x128xi32>
    %13 = vector.shape_cast %12 : vector<1x16x128xi32> to vector<16x128xi32>
    %c16_i32 = arith.constant 16 : i32
    %14 = arith.muli %arg1, %c16_i32 : i32
    %15 = tpu.iota {dimensions = array<i32: 0>} : vector<16x128xi32>
    %16 = vector.broadcast %14 : i32 to vector<16x128xi32>
    %17 = arith.addi %16, %15 : vector<16x128xi32>
    %c16_i32_13 = arith.constant 16 : i32
    %18 = vector.broadcast %c16_i32_13 : i32 to vector<16x128xi32>
    %19 = arith.cmpi slt, %17, %18 : vector<16x128xi32>
    %c1_i32 = arith.constant 1 : i32
    %20 = vector.broadcast %c1_i32 : i32 to vector<16x128xi32>
    %21 = arith.cmpi eq, %13, %20 : vector<16x128xi32>
    %cst = arith.constant 0.699999988 : f32
    %cst_14 = arith.constant 3.000000e-01 : f32
    %22 = vector.broadcast %cst : f32 to vector<16x128xf32>
    %23 = vector.broadcast %cst_14 : f32 to vector<16x128xf32>
    %24 = arith.select %21, %22, %23 : vector<16x128xi1>, vector<16x128xf32>
    %cst_15 = arith.constant 0.000000e+00 : f32
    %25 = vector.broadcast %cst_15 : f32 to vector<16x128xf32>
    %26 = arith.select %19, %24, %25 : vector<16x128xi1>, vector<16x128xf32>
    %c1_i32_16 = arith.constant 1 : i32
    %27 = vector.broadcast %c1_i32_16 : i32 to vector<16x128xi32>
    %28 = arith.cmpi eq, %13, %27 : vector<16x128xi32>
    %29 = arith.subf %9, %11 : vector<16x128xf32>
    %30 = arith.subf %11, %9 : vector<16x128xf32>
    %31 = arith.select %28, %29, %30 : vector<16x128xi1>, vector<16x128xf32>
    %cst_17 = arith.constant 0.000000e+00 : f32
    %32 = vector.broadcast %cst_17 : f32 to vector<16x128xf32>
    %33 = arith.select %19, %31, %32 : vector<16x128xi1>, vector<16x128xf32>
    %cst_18 = arith.constant 0.000000e+00 : f32
    %34 = vector.broadcast %cst_18 : f32 to vector<16x128xf32>
    %35 = arith.maximumf %33, %34 : vector<16x128xf32>
    %36 = math.absf %33 : vector<16x128xf32>
    %cst_19 = arith.constant 0.000000e+00 : f32
    %37 = vector.broadcast %cst_19 : f32 to vector<16x128xf32>
    %38 = arith.subf %37, %36 : vector<16x128xf32>
    %39 = math.exp %38 : vector<16x128xf32>
    %cst_20 = arith.constant 1.000000e+00 : f32
    %40 = vector.broadcast %cst_20 : f32 to vector<16x128xf32>
    %41 = arith.addf %40, %39 : vector<16x128xf32>
    %42 = math.log %41 : vector<16x128xf32>
    %43 = arith.addf %35, %42 : vector<16x128xf32>
    %c0_21 = arith.constant 0 : index
    %c0_22 = arith.constant 0 : index
    %44 = vector.load %arg5[%c0_21, %c0_22] : memref<1x1xf32, #tpu.memory_space<vmem>>, vector<1x1xf32>
    %45 = arith.mulf %26, %43 : vector<16x128xf32>
    %46 = vector.shape_cast %45 : vector<16x128xf32> to vector<1x16x128xf32>
    %cst_23 = arith.constant dense<0.000000e+00> : vector<1xf32>
    %47 = vector.multi_reduction <add>, %46, %cst_23 [1, 2] : vector<1x16x128xf32> to vector<1xf32>
    %48 = vector.shape_cast %47 : vector<1xf32> to vector<1x1x1xf32>
    %49 = vector.extract %48[0, 0, 0] : f32 from vector<1x1x1xf32>
    %50 = vector.broadcast %49 : f32 to vector<1x1xf32>
    %51 = arith.addf %44, %50 : vector<1x1xf32>
    %c0_24 = arith.constant 0 : index
    %c0_25 = arith.constant 0 : index
    %52 = vector.load %arg5[%c0_24, %c0_25] : memref<1x1xf32, #tpu.memory_space<vmem>>, vector<1x1xf32>
    tpu.vector_store %arg5[%c0_24, %c0_25], %51 {strides = array<i32>} : memref<1x1xf32, #tpu.memory_space<vmem>>, vector<1x1xf32>,
    %c0_26 = arith.constant 0 : index
    %c0_27 = arith.constant 0 : index
    %53 = vector.load %arg6[%c0_26, %c0_27] : memref<1x1xf32, #tpu.memory_space<vmem>>, vector<1x1xf32>
    %54 = vector.shape_cast %26 : vector<16x128xf32> to vector<1x16x128xf32>
    %cst_28 = arith.constant dense<0.000000e+00> : vector<1xf32>
    %55 = vector.multi_reduction <add>, %54, %cst_28 [1, 2] : vector<1x16x128xf32> to vector<1xf32>
    %56 = vector.shape_cast %55 : vector<1xf32> to vector<1x1x1xf32>
    %57 = vector.extract %56[0, 0, 0] : f32 from vector<1x1x1xf32>
    %58 = vector.broadcast %57 : f32 to vector<1x1xf32>
    %59 = arith.addf %53, %58 : vector<1x1xf32>
    %c0_29 = arith.constant 0 : index
    %c0_30 = arith.constant 0 : index
    %60 = vector.load %arg6[%c0_29, %c0_30] : memref<1x1xf32, #tpu.memory_space<vmem>>, vector<1x1xf32>
    tpu.vector_store %arg6[%c0_29, %c0_30], %59 {strides = array<i32>} : memref<1x1xf32, #tpu.memory_space<vmem>>, vector<1x1xf32>,
    %61 = arith.extui %5 : i1 to i32
    %c0_i32_31 = arith.constant 0 : i32
    %62 = arith.cmpi ne, %61, %c0_i32_31 : i32
    scf.if %62 {
      %c0_32 = arith.constant 0 : index
      %c0_33 = arith.constant 0 : index
      %63 = vector.load %arg5[%c0_32, %c0_33] : memref<1x1xf32, #tpu.memory_space<vmem>>, vector<1x1xf32>
      %c0_34 = arith.constant 0 : index
      %c0_35 = arith.constant 0 : index
      %64 = vector.load %arg6[%c0_34, %c0_35] : memref<1x1xf32, #tpu.memory_space<vmem>>, vector<1x1xf32>
      %65 = arith.divf %63, %64 : vector<1x1xf32>
      %c0_36 = arith.constant 0 : index
      %c0_37 = arith.constant 0 : index
      %66 = vector.load %arg4[%c0_36, %c0_37] : memref<1x1xf32, #tpu.memory_space<vmem>>, vector<1x1xf32>
      tpu.vector_store %arg4[%c0_36, %c0_37], %65 {strides = array<i32>} : memref<1x1xf32, #tpu.memory_space<vmem>>, vector<1x1xf32>,
    } else {
    }
    return
  }
  func.func @transform_0(%arg0: i32, %arg1: i32) -> (i32, i32, i32, i32) {
    %c0_i32 = arith.constant 0 : i32
    %c0_i32_0 = arith.constant 0 : i32
    %c0_i32_1 = arith.constant 0 : i32
    return %arg0, %c0_i32, %arg1, %c0_i32_0 : i32, i32, i32, i32
  }
  func.func @transform_1(%arg0: i32, %arg1: i32) -> (i32, i32, i32) {
    %c0_i32 = arith.constant 0 : i32
    %c0_i32_0 = arith.constant 0 : i32
    return %arg0, %arg1, %c0_i32 : i32, i32, i32
  }
  func.func @transform_2(%arg0: i32, %arg1: i32) -> (i32, i32) {
    %c0_i32 = arith.constant 0 : i32
    %c0_i32_0 = arith.constant 0 : i32
    %c0_i32_1 = arith.constant 0 : i32
    return %c0_i32, %c0_i32_0 : i32, i32
  }
}

</mosaic_0001>

<llo_original>
// kernel: tpu_custom_call.1
$region0: #{tpu_custom_call.1}
  #allocation0 [shape = 'u32[]', space=smem, size = 0x4, offset = 0x4, fixed_abs, tag = 'smem constant byte address 0x4 - core index']
  #allocation1 [shape = 'u32[144,128]{1,0:T(1,128)}', space=vmem, size = 0x12000, scoped, tag = 'internal scratch']
  #allocation2 [shape = 'f32[1,1]{1,0:T(1,128)}', space=vmem, size = 0x200, scoped, tag = 'scratch operand']
  #allocation3 [shape = 'f32[1,1]{1,0:T(1,128)}', space=vmem, size = 0x200, scoped, tag = 'scratch operand']
  %s0 = inlined_call_operand.hbm [shape: f32[1,2,16,128], index: 0, kind: input, shape index: {}]
  %s1 = inlined_call_operand.hbm [shape: s32[1,16,128], index: 1, kind: input, shape index: {}]
  %s2 = inlined_call_operand.hbm [shape: f32[1,1], index: 2, kind: output, shape index: {}]
  %s3 = sld [smem:[#allocation0]]
  $region34: #{tpu_custom_call.1} parent=0
    _
  %s5 = ssub.s32 1, %s3
  %s6 = scalar_select 0, %s5, %s3
  $region1: #{tpu_custom_call.1} parent=0
    #allocation4 [shape = 'u8[16384]{0}', space=vmem, size = 0x4000, scoped, tag = 'input window, operand 0, single buffered']
    #allocation5 [shape = 's32[1]{0}', space=sflag, size = 0x4, scoped, tag = 'scoped memory for tpu_custom_call.1']
    #allocation6 [shape = 's32[1]{0}', space=sflag, size = 0x4, scoped, tag = 'scoped memory for tpu_custom_call.1']
    #allocation7 [shape = 'u8[8192]{0}', space=vmem, size = 0x2000, scoped, tag = 'input window, operand 1, single buffered']
    #allocation8 [shape = 's32[1]{0}', space=sflag, size = 0x4, scoped, tag = 'scoped memory for tpu_custom_call.1']
    #allocation9 [shape = 'u8[512]{0}', space=vmem, size = 0x400, scoped, tag = 'output window, operand 0, single buffered']
    %7 = vsyncpa [#allocation5], 0
    %8 = vsyncpa [#allocation8], 0
    %9 = vsyncpa [#allocation6], 0
    // Predicated region
    $region2: #{tpu_custom_call.1} parent=1 // pred_check
      _
    $region3: #{tpu_custom_call.1} parent=1 // pred_check_branch
      %11 = sbr.rel (0) target = $region5
    $region4: #{tpu_custom_call.1} parent=1 // pred_region
      %s13 = ssub.s32 512, 512
      %14 = vsyncadd [#allocation5], %s13
      %s15 = sshll.u32 [#allocation4], 4
      %s16 = int_to_ptr.vmem [resolvable:$true] %s15
      %21 = dma.hbm_to_vmem [thread:$0]  %s0, 512, %s16, [#allocation5], 128, 128, 8
    $region5: #{tpu_custom_call.1} parent=1 // pred_fallthru
      _
    // Predicated region
    $region6: #{tpu_custom_call.1} parent=1 // pred_check
      _
    $region7: #{tpu_custom_call.1} parent=1 // pred_check_branch
      %23 = sbr.rel (0) target = $region9
    $region8: #{tpu_custom_call.1} parent=1 // pred_region
      %s25 = ssub.s32 256, 256
      %26 = vsyncadd [#allocation8], %s25
      %s27 = sshll.u32 [#allocation7], 4
      %s28 = int_to_ptr.vmem [resolvable:$true] %s27
      %33 = dma.hbm_to_vmem [thread:$0]  %s1, 256, %s28, [#allocation8], 128, 128, 8
    $region9: #{tpu_custom_call.1} parent=1 // pred_fallthru
      _
    // Predicated region
    $region10: #{tpu_custom_call.1} parent=1 // pred_check
      _
    $region11: #{tpu_custom_call.1} parent=1 // pred_check_branch
      %35 = sbr.rel (0) target = $region13
    $region12: #{tpu_custom_call.1} parent=1 // pred_region
      %36 = dma.done [#allocation5], 512
    $region13: #{tpu_custom_call.1} parent=1 // pred_fallthru
      _
    // Predicated region
    $region14: #{tpu_custom_call.1} parent=1 // pred_check
      _
    $region15: #{tpu_custom_call.1} parent=1 // pred_check_branch
      %38 = sbr.rel (0) target = $region17
    $region16: #{tpu_custom_call.1} parent=1 // pred_region
      %39 = dma.done [#allocation8], 256
    $region17: #{tpu_custom_call.1} parent=1 // pred_fallthru
      _
    %p40 = scmp.eq.s32.totalorder 0, 0
    %p41 = scmp.eq.s32.totalorder 0, 0
    %p42 = pnand %p40, %p41
    %p43 = pneg %p42
    // Predicated region
    $region18: #{tpu_custom_call.1} parent=1 // pred_check
      _
    $region19: #{tpu_custom_call.1} parent=1 // pred_check_branch
      %45 = sbr.rel (%p42) target = $region21
    $region20: #{tpu_custom_call.1} parent=1 // pred_region
      %vm46 = vcmask 0
      %47 = vst.msk [vmem:[#allocation2] sm:$0x1] %vm46, 0.0
      %48 = vst.msk [vmem:[#allocation3] sm:$0x1] %vm46, 0.0
    $region21: #{tpu_custom_call.1} parent=1 // pred_fallthru
      _
    %v49 = vld [vmem:[#allocation4] sm:$0xff]
    %v50 = vld [vmem:[#allocation4 + $0x8] sm:$0xff]
    %s51 = scalar_lea.vmem [#allocation4], 16
    %v52 = vld [vmem:[%s51] sm:$0xff]
    %v53 = vld [vmem:[%s51 + $0x8] sm:$0xff]
    %v54 = vld [vmem:[#allocation7] sm:$0xff]
    %v55 = vld [vmem:[#allocation7 + $0x8] sm:$0xff]
    %s56 = smul.u32 0, 16
    %v57 = vlaneseq
    %v58 = vshrl.u32 %v57, 7
    %v59 = vadd.s32 %v58, 8
    %v60 = vstv %s56
    %v61 = vadd.s32 %v60, %v58
    %v62 = vadd.s32 %v60, %v59
    %vm63 = vcmp.lt.s32.totalorder %v61, 16
    %vm64 = vcmp.lt.s32.totalorder %v62, 16
    %vm65 = vcmp.eq.s32.totalorder %v54, 1
    %vm66 = vcmp.eq.s32.totalorder %v55, 1
    %v67 = vsel %vm65, 0.7, 0.3
    %v68 = vsel %vm66, 0.7, 0.3
    %v69 = vsel %vm63, %v67, 0.0
    %v70 = vsel %vm64, %v68, 0.0
    %v71 = vsub.f32 %v49, %v52
    %v72 = vsub.f32 %v50, %v53
    %v73 = vsub.f32 %v52, %v49
    %v74 = vsub.f32 %v53, %v50
    %v75 = vsel %vm65, %v71, %v73
    %v76 = vsel %vm66, %v72, %v74
    %v77 = vsel %vm63, %v75, 0.0
    %v78 = vsel %vm64, %v76, 0.0
    %v79 = vmax.f32 %v77, 0.0
    %v80 = vmax.f32 %v78, 0.0
    %v81 = vand.u32 2147483647, %v77
    %v82 = vand.u32 2147483647, %v78
    %v83 = vsub.f32 0.0, %v81
    %v84 = vsub.f32 0.0, %v82
    %v85 = vmul.f32 %v83, 1.442695
    %v86 = vpow.pop %v85
    %v87 = vmul.f32 %v84, 1.442695
    %v88 = vpow.pop %v87
    %v89 = vadd.f32 %v86, 1.0
    %v90 = vadd.f32 %v88, 1.0
    %v91 = vlog2.pop %v89
    %v92 = vmul.f32 %v91, 0.6931472
    %v93 = vlog2.pop %v90
    %v94 = vmul.f32 %v93, 0.6931472
    %v95 = vadd.f32 %v79, %v92
    %v96 = vadd.f32 %v80, %v94
    %v97 = vld [vmem:[#allocation2] sm:$0x1]
    %v98 = vmul.f32 %v69, %v95
    %v99 = vmul.f32 %v70, %v96
    %v100 = vadd.f32 %v98, %v99
    %101 = vadd.xlane.f32.xlu0 %v100
    %v102 = vpop.xlane.xlu0 %101
    %v103 = vrot.slane %v102, 4
    %v104 = vadd.f32 %v102, %v103
    %v105 = vrot.slane %v104, 2
    %v106 = vadd.f32 %v104, %v105
    %v107 = vrot.slane %v106, 1
    %v108 = vadd.f32 %v106, %v107
    %s109 = vtos %v108
    %v110 = vstv %s109
    %v111 = vadd.f32 %v97, %v110
    %vm112 = vcmask 0
    %113 = vst.msk [vmem:[#allocation2] sm:$0x1] %vm112, %v111
    %v114 = vld [vmem:[#allocation3] sm:$0x1]
    %v115 = vadd.f32 %v69, %v70
    %116 = vadd.xlane.f32.xlu0 %v115
    %v117 = vpop.xlane.xlu0 %116
    %v118 = vrot.slane %v117, 4
    %v119 = vadd.f32 %v117, %v118
    %v120 = vrot.slane %v119, 2
    %v121 = vadd.f32 %v119, %v120
    %v122 = vrot.slane %v121, 1
    %v123 = vadd.f32 %v121, %v122
    %s124 = vtos %v123
    %v125 = vstv %s124
    %v126 = vadd.f32 %v114, %v125
    %127 = vst.msk [vmem:[#allocation3] sm:$0x1] %vm112, %v126
    // Predicated region
    $region22: #{tpu_custom_call.1} parent=1 // pred_check
      _
    $region23: #{tpu_custom_call.1} parent=1 // pred_check_branch
      %129 = sbr.rel (%p42) target = $region25
    $region24: #{tpu_custom_call.1} parent=1 // pred_region
      %v130 = vld [vmem:[#allocation2] sm:$0x1]
      %v131 = vld [vmem:[#allocation3] sm:$0x1]
      %v132 = vrcp.pop %v131
      %v133 = vmul.f32 %v130, %v132
      %134 = vst.msk [vmem:[#allocation9] sm:$0x1] %vm112, %v133
    $region25: #{tpu_custom_call.1} parent=1 // pred_fallthru
      _
    // Predicated region
    $region26: #{tpu_custom_call.1} parent=1 // pred_check
      _
    $region27: #{tpu_custom_call.1} parent=1 // pred_check_branch
      %136 = sbr.rel (0) target = $region29
    $region28: #{tpu_custom_call.1} parent=1 // pred_region
      %s138 = ssub.s32 16, 16
      %139 = vsyncadd [#allocation6], %s138
      %s141 = sshll.u32 [#allocation9], 4
      %s142 = int_to_ptr.vmem [resolvable:$true] %s141
      %144 = dma.vmem_to_hbm [thread:$0]  %s142, 16, %s2, [#allocation6]
    $region29: #{tpu_custom_call.1} parent=1 // pred_fallthru
      _
    // Predicated region
    $region30: #{tpu_custom_call.1} parent=1 // pred_check
      _
    $region31: #{tpu_custom_call.1} parent=1 // pred_check_branch
      %146 = sbr.rel (0) target = $region33
    $region32: #{tpu_custom_call.1} parent=1 // pred_region
      %147 = dma.done [#allocation6], 16
    $region33: #{tpu_custom_call.1} parent=1 // pred_fallthru
      _
    %148 = vsyncpa [#allocation5], 1
    %149 = vsyncpa [#allocation8], 1
    %150 = vsyncpa [#allocation6], 1

</llo_original>
